<compile_context>
chip_gen: v7x
topology: tpu7x:2x2x1
jax: 0.10.0
libtpu: 0.0.40
codegen_flags: <defaults>
</compile_context>

<pallas_src>
import functools

import numpy as np
import jax
import jax.numpy as jnp
from jax.experimental import pallas as pl
from jax.experimental.pallas import tpu as pltpu


# ---------------------------------------------------------------------------
# Small constant tensors built host-side (pure glue, deterministic).
# ---------------------------------------------------------------------------
def _tap_masks(H, W):
    """(9, HW) 0/1 masks: mask[k, h*W+w] = 1 iff (h+dy, w+dx) is in-image,
    with dy = k//3 - 1, dx = k%3 - 1 (implements the zero padding)."""
    M = np.zeros((9, H * W), dtype=np.float32)
    for k in range(9):
        dy, dx = k // 3 - 1, k % 3 - 1
        for h in range(H):
            for w in range(W):
                if 0 <= h + dy < H and 0 <= w + dx < W:
                    M[k, h * W + w] = 1.0
    return M


def _pool_matrix_T(H, W):
    """(HW, HWo): 2x2 / stride-2 average pooling as a right-matmul."""
    Ho, Wo = H // 2, W // 2
    PT = np.zeros((H * W, Ho * Wo), dtype=np.float32)
    for ho in range(Ho):
        for wo in range(Wo):
            q = ho * Wo + wo
            for dy in range(2):
                for dx in range(2):
                    PT[(2 * ho + dy) * W + (2 * wo + dx), q] = 0.25
    return PT


def _round_up(n, m):
    return ((n + m - 1) // m) * m


# ---------------------------------------------------------------------------
# Pallas kernel: one batch element per grid step, layout (C, HW).
# ---------------------------------------------------------------------------
def _d_cell_kernel(x_ref, m_ref, w1_ref, b1_ref, w2_ref, b2_ref, pt_ref,
                   o_ref, *, H, W):
    x = x_ref[0]              # (Cin_p, HW) f32
    masks = m_ref[...]        # (9, HW)    f32, 0/1 boundary masks

    def shift_flat(a, off):
        # s[:, p] = a[:, p + off] for in-range flat index, 0 otherwise.
        if off == 0:
            return a
        pad = jnp.zeros((a.shape[0], abs(off)), a.dtype)
        if off > 0:
            return jnp.concatenate([a[:, off:], pad], axis=1)
        return jnp.concatenate([pad, a[:, :off]], axis=1)

    def conv3x3(a, w_flat, bias):
        # a: (C, HW) f32 ; w_flat: (Cout_p, 9*C) bf16 ; bias: (Cout_p, 1) f32
        pieces = []
        for k in range(9):                      # static unroll over the taps
            dy, dx = k // 3 - 1, k % 3 - 1
            pieces.append(shift_flat(a, dy * W + dx) * masks[k:k + 1, :])
        # tile-aligned sublane stack (each piece has a multiple-of-8 rows)
        stack = jnp.concatenate(pieces, axis=0).astype(jnp.bfloat16)
        acc = jnp.dot(w_flat, stack, preferred_element_type=jnp.float32)
        acc = acc + bias
        return jnp.where(acc > 0, acc, 0.2 * acc)          # (Cout_p, HW) f32

    # conv1 + LeakyReLU(0.2)   (equalized-LR scale folded into w1)
    h1 = conv3x3(x, w1_ref[...], b1_ref[...])
    # conv2 + LeakyReLU(0.2)   (equalized-LR scale folded into w2)
    h2 = conv3x3(h1, w2_ref[...], b2_ref[...])

    # AvgPool2d(2,2) as one small (Cout_p, HW) @ (HW, HWo) bf16 matmul.
    o_ref[0] = jnp.dot(h2.astype(jnp.bfloat16), pt_ref[...],
                       preferred_element_type=jnp.float32)


# ---------------------------------------------------------------------------
# Wrapper (layout glue + pallas_call).
# ---------------------------------------------------------------------------
def d_cell_forward(x_nchw, w1, b1, w2, b2):
    N, Cin, H, W = x_nchw.shape
    Cout = w1.shape[0]
    assert H % 2 == 0 and W % 2 == 0
    HW = H * W
    Ho, Wo = H // 2, W // 2
    HWo = Ho * Wo

    # channel padding to the f32 sublane tile (padded rows/cols are zero)
    Cin_p = _round_up(Cin, 8)
    Cout_p = _round_up(Cout, 8)

    # equalized-LR scales (sqrt(2 / fan_in)), folded into the weights
    scale1 = float(np.sqrt(2.0 / (Cin * 9)))
    scale2 = float(np.sqrt(2.0 / (Cout * 9)))

    # NCHW -> (N, Cin_p, HW): channels on sublanes, flat spatial on lanes.
    x_flat = jnp.pad(x_nchw.reshape(N, Cin, HW).astype(jnp.float32),
                     ((0, 0), (0, Cin_p - Cin), (0, 0)))

    def prep_w(w, cin, cin_p, scale):
        cout = w.shape[0]
        wk = jnp.transpose(w.reshape(cout, cin, 9), (0, 2, 1))   # (cout,9,cin)
        wk = jnp.pad(wk, ((0, Cout_p - cout), (0, 0), (0, cin_p - cin)))
        return (wk.reshape(Cout_p, 9 * cin_p) * scale).astype(jnp.bfloat16)

    w1_f = prep_w(w1, Cin, Cin_p, scale1)           # (Cout_p, 9*Cin_p)  bf16
    w2_f = prep_w(w2, Cout, Cout_p, scale2)         # (Cout_p, 9*Cout_p) bf16
    b1_r = jnp.pad(b1.astype(jnp.float32), (0, Cout_p - Cout)).reshape(Cout_p, 1)
    b2_r = jnp.pad(b2.astype(jnp.float32), (0, Cout_p - Cout)).reshape(Cout_p, 1)

    masks = jnp.asarray(_tap_masks(H, W), dtype=jnp.float32)        # (9, HW)
    pool_t = jnp.asarray(_pool_matrix_T(H, W), dtype=jnp.bfloat16)  # (HW, HWo)

    kernel = functools.partial(_d_cell_kernel, H=H, W=W)

    out_flat = pl.pallas_call(
        kernel,
        out_shape=jax.ShapeDtypeStruct((N, Cout_p, HWo), jnp.float32),
        grid_spec=pltpu.PrefetchScalarGridSpec(
            num_scalar_prefetch=0,
            grid=(N,),
            in_specs=[
                pl.BlockSpec((1, Cin_p, HW), lambda b: (b, 0, 0)),     # x
                pl.BlockSpec((9, HW), lambda b: (0, 0)),               # tap masks
                pl.BlockSpec((Cout_p, 9 * Cin_p), lambda b: (0, 0)),   # W1
                pl.BlockSpec((Cout_p, 1), lambda b: (0, 0)),           # b1
                pl.BlockSpec((Cout_p, 9 * Cout_p), lambda b: (0, 0)),  # W2
                pl.BlockSpec((Cout_p, 1), lambda b: (0, 0)),           # b2
                pl.BlockSpec((HW, HWo), lambda b: (0, 0)),             # pool^T
            ],
            out_specs=pl.BlockSpec((1, Cout_p, HWo), lambda b: (b, 0, 0)),
        ),
        compiler_params=pltpu.CompilerParams(
            dimension_semantics=("parallel",)),
    )(x_flat, masks, w1_f, b1_r, w2_f, b2_r, pool_t)

    # (N, Cout_p, HWo) -> NCHW (N, Cout, H/2, W/2); padded channels dropped.
    return out_flat[:, :Cout, :].reshape(N, Cout, Ho, Wo)


# ---------------------------------------------------------------------------
# Pure-JAX reference (same math, NCHW) for a silent sanity check.
# ---------------------------------------------------------------------------
def d_cell_reference(x, w1, b1, w2, b2):
    Cin = x.shape[1]
    Cout = w1.shape[0]
    scale1 = np.sqrt(2.0 / (Cin * 9))
    scale2 = np.sqrt(2.0 / (Cout * 9))

    def conv(a, w, b, s):
        dn = jax.lax.conv_dimension_numbers(a.shape, w.shape,
                                            ("NCHW", "OIHW", "NCHW"))
        h = jax.lax.conv_general_dilated(a, w * s, (1, 1), ((1, 1), (1, 1)),
                                         dimension_numbers=dn)
        return h + b.reshape(1, -1, 1, 1)

    h = conv(x, w1, b1, scale1)
    h = jnp.where(h > 0, h, 0.2 * h)
    h = conv(h, w2, b2, scale2)
    h = jnp.where(h > 0, h, 0.2 * h)
    N, C, H, W = h.shape
    return h.reshape(N, C, H // 2, 2, W // 2, 2).mean(axis=(3, 5))


if __name__ == "__main__":
    key = jax.random.PRNGKey(0)
    kx, k1, k2 = jax.random.split(key, 3)

    N, Cin, Cout, H, W = 2, 4, 8, 16, 16
    x = jax.random.normal(kx, (N, Cin, H, W), jnp.float32)

    # Deterministic params matching D_Cell.__init__(sb=0):
    #   econv1.weight ~ N(0,1), econv1.bias = 0
    #   econv2.weight keeps EqualizedLR_Conv2d default N(0,1) init,
    #   econv2.bias ends up zeros (normal_ then zeros_).
    w1 = jax.random.normal(k1, (Cout, Cin, 3, 3), jnp.float32)
    b1 = jnp.zeros((Cout,), jnp.float32)
    w2 = jax.random.normal(k2, (Cout, Cout, 3, 3), jnp.float32)
    b2 = jnp.zeros((Cout,), jnp.float32)

    out = jax.block_until_ready(d_cell_forward(x, w1, b1, w2, b2))

    ref = d_cell_reference(x, w1, b1, w2, b2)
    assert out.shape == (N, Cout, H // 2, W // 2), out.shape
    max_err = float(jnp.max(jnp.abs(out - ref)))
    assert max_err < 5e-2, f"kernel/reference mismatch: {max_err}"

    print("KERNEL_OK")
</pallas_src>

<mosaic_0001>
module attributes {stable_mosaic.version = 11 : i64} {
  func.func @_d_cell_kernel(%arg0: i32, %arg1: memref<1x8x256xf32, #tpu.memory_space<vmem>>, %arg2: memref<9x256xf32, #tpu.memory_space<vmem>>, %arg3: memref<8x72xbf16, #tpu.memory_space<vmem>>, %arg4: memref<8x1xf32, #tpu.memory_space<vmem>>, %arg5: memref<8x72xbf16, #tpu.memory_space<vmem>>, %arg6: memref<8x1xf32, #tpu.memory_space<vmem>>, %arg7: memref<256x64xbf16, #tpu.memory_space<vmem>>, %arg8: memref<1x8x64xf32, #tpu.memory_space<vmem>>) attributes {dimension_semantics = [#tpu.dimension_semantics<parallel>], iteration_bounds = array<i64: 2>, scalar_prefetch = 0 : i64, scratch_operands = 0 : i64, tpu.core_type = #tpu.core_type<tc>, window_params = [{transform_indices = @transform_0, window_bounds = array<i64: 1, 8, 256>}, {pipeline_mode = #tpu.pipeline_mode<synchronous>, transform_indices = @transform_1, window_bounds = array<i64: 9, 256>}, {pipeline_mode = #tpu.pipeline_mode<synchronous>, transform_indices = @transform_2, window_bounds = array<i64: 8, 72>}, {pipeline_mode = #tpu.pipeline_mode<synchronous>, transform_indices = @transform_3, window_bounds = array<i64: 8, 1>}, {pipeline_mode = #tpu.pipeline_mode<synchronous>, transform_indices = @transform_4, window_bounds = array<i64: 8, 72>}, {pipeline_mode = #tpu.pipeline_mode<synchronous>, transform_indices = @transform_5, window_bounds = array<i64: 8, 1>}, {pipeline_mode = #tpu.pipeline_mode<synchronous>, transform_indices = @transform_6, window_bounds = array<i64: 256, 64>}, {transform_indices = @transform_7, window_bounds = array<i64: 1, 8, 64>}]} {
    %c0 = arith.constant 0 : index
    %c0_0 = arith.constant 0 : index
    %c0_1 = arith.constant 0 : index
    %0 = vector.load %arg1[%c0, %c0_0, %c0_1] : memref<1x8x256xf32, #tpu.memory_space<vmem>>, vector<1x8x256xf32>
    %1 = vector.shape_cast %0 : vector<1x8x256xf32> to vector<8x256xf32>
    %c0_2 = arith.constant 0 : index
    %c0_3 = arith.constant 0 : index
    %2 = vector.load %arg2[%c0_2, %c0_3] : memref<9x256xf32, #tpu.memory_space<vmem>>, vector<9x256xf32>
    %c0_4 = arith.constant 0 : index
    %c0_5 = arith.constant 0 : index
    %3 = vector.load %arg3[%c0_4, %c0_5] : memref<8x72xbf16, #tpu.memory_space<vmem>>, vector<8x72xbf16>
    %c0_6 = arith.constant 0 : index
    %c0_7 = arith.constant 0 : index
    %4 = vector.load %arg4[%c0_6, %c0_7] : memref<8x1xf32, #tpu.memory_space<vmem>>, vector<8x1xf32>
    %cst = arith.constant 0.000000e+00 : f32
    %5 = vector.broadcast %cst : f32 to vector<8x17xf32>
    %6 = vector.extract_strided_slice %1 {offsets = [0, 0], sizes = [8, 239], strides = [1, 1]} : vector<8x256xf32> to vector<8x239xf32>
    %7 = tpu.concatenate %5, %6 in 1 : vector<8x17xf32>, vector<8x239xf32> -> vector<8x256xf32>
    %8 = vector.extract_strided_slice %2 {offsets = [0, 0], sizes = [1, 256], strides = [1, 1]} : vector<9x256xf32> to vector<1x256xf32>
    %9 = vector.broadcast %8 : vector<1x256xf32> to vector<8x256xf32>
    %10 = arith.mulf %7, %9 : vector<8x256xf32>
    %cst_8 = arith.constant 0.000000e+00 : f32
    %11 = vector.broadcast %cst_8 : f32 to vector<8x16xf32>
    %12 = vector.extract_strided_slice %1 {offsets = [0, 0], sizes = [8, 240], strides = [1, 1]} : vector<8x256xf32> to vector<8x240xf32>
    %13 = tpu.concatenate %11, %12 in 1 : vector<8x16xf32>, vector<8x240xf32> -> vector<8x256xf32>
    %14 = vector.extract_strided_slice %2 {offsets = [1, 0], sizes = [1, 256], strides = [1, 1]} : vector<9x256xf32> to vector<1x256xf32>
    %15 = vector.broadcast %14 : vector<1x256xf32> to vector<8x256xf32>
    %16 = arith.mulf %13, %15 : vector<8x256xf32>
    %cst_9 = arith.constant 0.000000e+00 : f32
    %17 = vector.broadcast %cst_9 : f32 to vector<8x15xf32>
    %18 = vector.extract_strided_slice %1 {offsets = [0, 0], sizes = [8, 241], strides = [1, 1]} : vector<8x256xf32> to vector<8x241xf32>
    %19 = tpu.concatenate %17, %18 in 1 : vector<8x15xf32>, vector<8x241xf32> -> vector<8x256xf32>
    %20 = vector.extract_strided_slice %2 {offsets = [2, 0], sizes = [1, 256], strides = [1, 1]} : vector<9x256xf32> to vector<1x256xf32>
    %21 = vector.broadcast %20 : vector<1x256xf32> to vector<8x256xf32>
    %22 = arith.mulf %19, %21 : vector<8x256xf32>
    %cst_10 = arith.constant 0.000000e+00 : f32
    %23 = vector.broadcast %cst_10 : f32 to vector<8x1xf32>
    %24 = vector.extract_strided_slice %1 {offsets = [0, 0], sizes = [8, 255], strides = [1, 1]} : vector<8x256xf32> to vector<8x255xf32>
    %25 = tpu.concatenate %23, %24 in 1 : vector<8x1xf32>, vector<8x255xf32> -> vector<8x256xf32>
    %26 = vector.extract_strided_slice %2 {offsets = [3, 0], sizes = [1, 256], strides = [1, 1]} : vector<9x256xf32> to vector<1x256xf32>
    %27 = vector.broadcast %26 : vector<1x256xf32> to vector<8x256xf32>
    %28 = arith.mulf %25, %27 : vector<8x256xf32>
    %29 = vector.extract_strided_slice %2 {offsets = [4, 0], sizes = [1, 256], strides = [1, 1]} : vector<9x256xf32> to vector<1x256xf32>
    %30 = vector.broadcast %29 : vector<1x256xf32> to vector<8x256xf32>
    %31 = arith.mulf %1, %30 : vector<8x256xf32>
    %cst_11 = arith.constant 0.000000e+00 : f32
    %32 = vector.broadcast %cst_11 : f32 to vector<8x1xf32>
    %33 = vector.extract_strided_slice %1 {offsets = [0, 1], sizes = [8, 255], strides = [1, 1]} : vector<8x256xf32> to vector<8x255xf32>
    %34 = tpu.concatenate %33, %32 in 1 : vector<8x255xf32>, vector<8x1xf32> -> vector<8x256xf32>
    %35 = vector.extract_strided_slice %2 {offsets = [5, 0], sizes = [1, 256], strides = [1, 1]} : vector<9x256xf32> to vector<1x256xf32>
    %36 = vector.broadcast %35 : vector<1x256xf32> to vector<8x256xf32>
    %37 = arith.mulf %34, %36 : vector<8x256xf32>
    %cst_12 = arith.constant 0.000000e+00 : f32
    %38 = vector.broadcast %cst_12 : f32 to vector<8x15xf32>
    %39 = vector.extract_strided_slice %1 {offsets = [0, 15], sizes = [8, 241], strides = [1, 1]} : vector<8x256xf32> to vector<8x241xf32>
    %40 = tpu.concatenate %39, %38 in 1 : vector<8x241xf32>, vector<8x15xf32> -> vector<8x256xf32>
    %41 = vector.extract_strided_slice %2 {offsets = [6, 0], sizes = [1, 256], strides = [1, 1]} : vector<9x256xf32> to vector<1x256xf32>
    %42 = vector.broadcast %41 : vector<1x256xf32> to vector<8x256xf32>
    %43 = arith.mulf %40, %42 : vector<8x256xf32>
    %cst_13 = arith.constant 0.000000e+00 : f32
    %44 = vector.broadcast %cst_13 : f32 to vector<8x16xf32>
    %45 = vector.extract_strided_slice %1 {offsets = [0, 16], sizes = [8, 240], strides = [1, 1]} : vector<8x256xf32> to vector<8x240xf32>
    %46 = tpu.concatenate %45, %44 in 1 : vector<8x240xf32>, vector<8x16xf32> -> vector<8x256xf32>
    %47 = vector.extract_strided_slice %2 {offsets = [7, 0], sizes = [1, 256], strides = [1, 1]} : vector<9x256xf32> to vector<1x256xf32>
    %48 = vector.broadcast %47 : vector<1x256xf32> to vector<8x256xf32>
    %49 = arith.mulf %46, %48 : vector<8x256xf32>
    %cst_14 = arith.constant 0.000000e+00 : f32
    %50 = vector.broadcast %cst_14 : f32 to vector<8x17xf32>
    %51 = vector.extract_strided_slice %1 {offsets = [0, 17], sizes = [8, 239], strides = [1, 1]} : vector<8x256xf32> to vector<8x239xf32>
    %52 = tpu.concatenate %51, %50 in 1 : vector<8x239xf32>, vector<8x17xf32> -> vector<8x256xf32>
    %53 = vector.extract_strided_slice %2 {offsets = [8, 0], sizes = [1, 256], strides = [1, 1]} : vector<9x256xf32> to vector<1x256xf32>
    %54 = vector.broadcast %53 : vector<1x256xf32> to vector<8x256xf32>
    %55 = arith.mulf %52, %54 : vector<8x256xf32>
    %56 = tpu.concatenate %10, %16, %22, %28, %31, %37, %43, %49, %55 in 0 : vector<8x256xf32>, vector<8x256xf32>, vector<8x256xf32>, vector<8x256xf32>, vector<8x256xf32>, vector<8x256xf32>, vector<8x256xf32>, vector<8x256xf32>, vector<8x256xf32> -> vector<72x256xf32>
    %57 = arith.truncf %56 : vector<72x256xf32> to vector<72x256xbf16>
    %cst_15 = arith.constant dense<0.000000e+00> : vector<8x256xf32>
    %58 = tpu.matmul %3, %57, %cst_15 {dimension_numbers = #tpu.dot_dimension_numbers<[1], [0], [0], [1], [0, 0, 1, 1], [], []>} : vector<8x72xbf16>, vector<72x256xbf16>, vector<8x256xf32> -> vector<8x256xf32>
    %59 = vector.broadcast %4 : vector<8x1xf32> to vector<8x256xf32>
    %60 = arith.addf %58, %59 : vector<8x256xf32>
    %cst_16 = arith.constant 0.000000e+00 : f32
    %61 = vector.broadcast %cst_16 : f32 to vector<8x256xf32>
    %62 = arith.cmpf ogt, %60, %61 : vector<8x256xf32>
    %cst_17 = arith.constant 2.000000e-01 : f32
    %63 = vector.broadcast %cst_17 : f32 to vector<8x256xf32>
    %64 = arith.mulf %63, %60 : vector<8x256xf32>
    %65 = arith.select %62, %60, %64 : vector<8x256xi1>, vector<8x256xf32>
    %c0_18 = arith.constant 0 : index
    %c0_19 = arith.constant 0 : index
    %66 = vector.load %arg5[%c0_18, %c0_19] : memref<8x72xbf16, #tpu.memory_space<vmem>>, vector<8x72xbf16>
    %c0_20 = arith.constant 0 : index
    %c0_21 = arith.constant 0 : index
    %67 = vector.load %arg6[%c0_20, %c0_21] : memref<8x1xf32, #tpu.memory_space<vmem>>, vector<8x1xf32>
    %cst_22 = arith.constant 0.000000e+00 : f32
    %68 = vector.broadcast %cst_22 : f32 to vector<8x17xf32>
    %69 = vector.extract_strided_slice %65 {offsets = [0, 0], sizes = [8, 239], strides = [1, 1]} : vector<8x256xf32> to vector<8x239xf32>
    %70 = tpu.concatenate %68, %69 in 1 : vector<8x17xf32>, vector<8x239xf32> -> vector<8x256xf32>
    %71 = vector.extract_strided_slice %2 {offsets = [0, 0], sizes = [1, 256], strides = [1, 1]} : vector<9x256xf32> to vector<1x256xf32>
    %72 = vector.broadcast %71 : vector<1x256xf32> to vector<8x256xf32>
    %73 = arith.mulf %70, %72 : vector<8x256xf32>
    %cst_23 = arith.constant 0.000000e+00 : f32
    %74 = vector.broadcast %cst_23 : f32 to vector<8x16xf32>
    %75 = vector.extract_strided_slice %65 {offsets = [0, 0], sizes = [8, 240], strides = [1, 1]} : vector<8x256xf32> to vector<8x240xf32>
    %76 = tpu.concatenate %74, %75 in 1 : vector<8x16xf32>, vector<8x240xf32> -> vector<8x256xf32>
    %77 = vector.extract_strided_slice %2 {offsets = [1, 0], sizes = [1, 256], strides = [1, 1]} : vector<9x256xf32> to vector<1x256xf32>
    %78 = vector.broadcast %77 : vector<1x256xf32> to vector<8x256xf32>
    %79 = arith.mulf %76, %78 : vector<8x256xf32>
    %cst_24 = arith.constant 0.000000e+00 : f32
    %80 = vector.broadcast %cst_24 : f32 to vector<8x15xf32>
    %81 = vector.extract_strided_slice %65 {offsets = [0, 0], sizes = [8, 241], strides = [1, 1]} : vector<8x256xf32> to vector<8x241xf32>
    %82 = tpu.concatenate %80, %81 in 1 : vector<8x15xf32>, vector<8x241xf32> -> vector<8x256xf32>
    %83 = vector.extract_strided_slice %2 {offsets = [2, 0], sizes = [1, 256], strides = [1, 1]} : vector<9x256xf32> to vector<1x256xf32>
    %84 = vector.broadcast %83 : vector<1x256xf32> to vector<8x256xf32>
    %85 = arith.mulf %82, %84 : vector<8x256xf32>
    %cst_25 = arith.constant 0.000000e+00 : f32
    %86 = vector.broadcast %cst_25 : f32 to vector<8x1xf32>
    %87 = vector.extract_strided_slice %65 {offsets = [0, 0], sizes = [8, 255], strides = [1, 1]} : vector<8x256xf32> to vector<8x255xf32>
    %88 = tpu.concatenate %86, %87 in 1 : vector<8x1xf32>, vector<8x255xf32> -> vector<8x256xf32>
    %89 = vector.extract_strided_slice %2 {offsets = [3, 0], sizes = [1, 256], strides = [1, 1]} : vector<9x256xf32> to vector<1x256xf32>
    %90 = vector.broadcast %89 : vector<1x256xf32> to vector<8x256xf32>
    %91 = arith.mulf %88, %90 : vector<8x256xf32>
    %92 = vector.extract_strided_slice %2 {offsets = [4, 0], sizes = [1, 256], strides = [1, 1]} : vector<9x256xf32> to vector<1x256xf32>
    %93 = vector.broadcast %92 : vector<1x256xf32> to vector<8x256xf32>
    %94 = arith.mulf %65, %93 : vector<8x256xf32>
    %cst_26 = arith.constant 0.000000e+00 : f32
    %95 = vector.broadcast %cst_26 : f32 to vector<8x1xf32>
    %96 = vector.extract_strided_slice %65 {offsets = [0, 1], sizes = [8, 255], strides = [1, 1]} : vector<8x256xf32> to vector<8x255xf32>
    %97 = tpu.concatenate %96, %95 in 1 : vector<8x255xf32>, vector<8x1xf32> -> vector<8x256xf32>
    %98 = vector.extract_strided_slice %2 {offsets = [5, 0], sizes = [1, 256], strides = [1, 1]} : vector<9x256xf32> to vector<1x256xf32>
    %99 = vector.broadcast %98 : vector<1x256xf32> to vector<8x256xf32>
    %100 = arith.mulf %97, %99 : vector<8x256xf32>
    %cst_27 = arith.constant 0.000000e+00 : f32
    %101 = vector.broadcast %cst_27 : f32 to vector<8x15xf32>
    %102 = vector.extract_strided_slice %65 {offsets = [0, 15], sizes = [8, 241], strides = [1, 1]} : vector<8x256xf32> to vector<8x241xf32>
    %103 = tpu.concatenate %102, %101 in 1 : vector<8x241xf32>, vector<8x15xf32> -> vector<8x256xf32>
    %104 = vector.extract_strided_slice %2 {offsets = [6, 0], sizes = [1, 256], strides = [1, 1]} : vector<9x256xf32> to vector<1x256xf32>
    %105 = vector.broadcast %104 : vector<1x256xf32> to vector<8x256xf32>
    %106 = arith.mulf %103, %105 : vector<8x256xf32>
    %cst_28 = arith.constant 0.000000e+00 : f32
    %107 = vector.broadcast %cst_28 : f32 to vector<8x16xf32>
    %108 = vector.extract_strided_slice %65 {offsets = [0, 16], sizes = [8, 240], strides = [1, 1]} : vector<8x256xf32> to vector<8x240xf32>
    %109 = tpu.concatenate %108, %107 in 1 : vector<8x240xf32>, vector<8x16xf32> -> vector<8x256xf32>
    %110 = vector.extract_strided_slice %2 {offsets = [7, 0], sizes = [1, 256], strides = [1, 1]} : vector<9x256xf32> to vector<1x256xf32>
    %111 = vector.broadcast %110 : vector<1x256xf32> to vector<8x256xf32>
    %112 = arith.mulf %109, %111 : vector<8x256xf32>
    %cst_29 = arith.constant 0.000000e+00 : f32
    %113 = vector.broadcast %cst_29 : f32 to vector<8x17xf32>
    %114 = vector.extract_strided_slice %65 {offsets = [0, 17], sizes = [8, 239], strides = [1, 1]} : vector<8x256xf32> to vector<8x239xf32>
    %115 = tpu.concatenate %114, %113 in 1 : vector<8x239xf32>, vector<8x17xf32> -> vector<8x256xf32>
    %116 = vector.extract_strided_slice %2 {offsets = [8, 0], sizes = [1, 256], strides = [1, 1]} : vector<9x256xf32> to vector<1x256xf32>
    %117 = vector.broadcast %116 : vector<1x256xf32> to vector<8x256xf32>
    %118 = arith.mulf %115, %117 : vector<8x256xf32>
    %119 = tpu.concatenate %73, %79, %85, %91, %94, %100, %106, %112, %118 in 0 : vector<8x256xf32>, vector<8x256xf32>, vector<8x256xf32>, vector<8x256xf32>, vector<8x256xf32>, vector<8x256xf32>, vector<8x256xf32>, vector<8x256xf32>, vector<8x256xf32> -> vector<72x256xf32>
    %120 = arith.truncf %119 : vector<72x256xf32> to vector<72x256xbf16>
    %cst_30 = arith.constant dense<0.000000e+00> : vector<8x256xf32>
    %121 = tpu.matmul %66, %120, %cst_30 {dimension_numbers = #tpu.dot_dimension_numbers<[1], [0], [0], [1], [0, 0, 1, 1], [], []>} : vector<8x72xbf16>, vector<72x256xbf16>, vector<8x256xf32> -> vector<8x256xf32>
    %122 = vector.broadcast %67 : vector<8x1xf32> to vector<8x256xf32>
    %123 = arith.addf %121, %122 : vector<8x256xf32>
    %cst_31 = arith.constant 0.000000e+00 : f32
    %124 = vector.broadcast %cst_31 : f32 to vector<8x256xf32>
    %125 = arith.cmpf ogt, %123, %124 : vector<8x256xf32>
    %cst_32 = arith.constant 2.000000e-01 : f32
    %126 = vector.broadcast %cst_32 : f32 to vector<8x256xf32>
    %127 = arith.mulf %126, %123 : vector<8x256xf32>
    %128 = arith.select %125, %123, %127 : vector<8x256xi1>, vector<8x256xf32>
    %129 = arith.truncf %128 : vector<8x256xf32> to vector<8x256xbf16>
    %c0_33 = arith.constant 0 : index
    %c0_34 = arith.constant 0 : index
    %130 = vector.load %arg7[%c0_33, %c0_34] : memref<256x64xbf16, #tpu.memory_space<vmem>>, vector<256x64xbf16>
    %cst_35 = arith.constant dense<0.000000e+00> : vector<8x64xf32>
    %131 = tpu.matmul %129, %130, %cst_35 {dimension_numbers = #tpu.dot_dimension_numbers<[1], [0], [0], [1], [0, 0, 1, 1], [], []>} : vector<8x256xbf16>, vector<256x64xbf16>, vector<8x64xf32> -> vector<8x64xf32>
    %c0_36 = arith.constant 0 : index
    %c0_37 = arith.constant 0 : index
    %c0_38 = arith.constant 0 : index
    %132 = vector.load %arg8[%c0_36, %c0_37, %c0_38] : memref<1x8x64xf32, #tpu.memory_space<vmem>>, vector<1x8x64xf32>
    %133 = vector.shape_cast %132 : vector<1x8x64xf32> to vector<8x64xf32>
    %134 = vector.shape_cast %131 : vector<8x64xf32> to vector<1x8x64xf32>
    tpu.vector_store %arg8[%c0_36, %c0_37, %c0_38], %134 {strides = array<i32>} : memref<1x8x64xf32, #tpu.memory_space<vmem>>, vector<1x8x64xf32>,
    return
  }
  func.func @transform_0(%arg0: i32) -> (i32, i32, i32) {
    %c0_i32 = arith.constant 0 : i32
    %c0_i32_0 = arith.constant 0 : i32
    %c0_i32_1 = arith.constant 0 : i32
    return %arg0, %c0_i32, %c0_i32_0 : i32, i32, i32
  }
  func.func @transform_1(%arg0: i32) -> (i32, i32) {
    %c0_i32 = arith.constant 0 : i32
    %c0_i32_0 = arith.constant 0 : i32
    %c0_i32_1 = arith.constant 0 : i32
    return %c0_i32, %c0_i32_0 : i32, i32
  }
  func.func @transform_2(%arg0: i32) -> (i32, i32) {
    %c0_i32 = arith.constant 0 : i32
    %c0_i32_0 = arith.constant 0 : i32
    %c0_i32_1 = arith.constant 0 : i32
    return %c0_i32, %c0_i32_0 : i32, i32
  }
  func.func @transform_3(%arg0: i32) -> (i32, i32) {
    %c0_i32 = arith.constant 0 : i32
    %c0_i32_0 = arith.constant 0 : i32
    %c0_i32_1 = arith.constant 0 : i32
    return %c0_i32, %c0_i32_0 : i32, i32
  }
  func.func @transform_4(%arg0: i32) -> (i32, i32) {
    %c0_i32 = arith.constant 0 : i32
    %c0_i32_0 = arith.constant 0 : i32
    %c0_i32_1 = arith.constant 0 : i32
    return %c0_i32, %c0_i32_0 : i32, i32
  }
  func.func @transform_5(%arg0: i32) -> (i32, i32) {
    %c0_i32 = arith.constant 0 : i32
    %c0_i32_0 = arith.constant 0 : i32
    %c0_i32_1 = arith.constant 0 : i32
    return %c0_i32, %c0_i32_0 : i32, i32
  }
  func.func @transform_6(%arg0: i32) -> (i32, i32) {
    %c0_i32 = arith.constant 0 : i32
    %c0_i32_0 = arith.constant 0 : i32
    %c0_i32_1 = arith.constant 0 : i32
    return %c0_i32, %c0_i32_0 : i32, i32
  }
  func.func @transform_7(%arg0: i32) -> (i32, i32, i32) {
    %c0_i32 = arith.constant 0 : i32
    %c0_i32_0 = arith.constant 0 : i32
    %c0_i32_1 = arith.constant 0 : i32
    return %arg0, %c0_i32, %c0_i32_0 : i32, i32, i32
  }
}

</mosaic_0001>

<llo_original>
// kernel: tpu_custom_call.1
$region0: #{tpu_custom_call.1}
  #allocation0 [shape = 'u32[]', space=smem, size = 0x4, offset = 0x4, fixed_abs, tag = 'smem constant byte address 0x4 - core index']
  #allocation1 [shape = 'u32[144,128]{1,0:T(1,128)}', space=vmem, size = 0x12000, scoped, tag = 'internal scratch']
  %s0 = inlined_call_operand.vmem [shape: f32[2,8,256], index: 0, kind: input, shape index: {}]
  %s1 = inlined_call_operand.vmem [shape: f32[9,256], index: 1, kind: input, shape index: {}]
  %s2 = inlined_call_operand.vmem [shape: bf16[8,72], index: 2, kind: input, shape index: {}]
  %s3 = inlined_call_operand.vmem [shape: f32[8,1], index: 3, kind: input, shape index: {}]
  %s4 = inlined_call_operand.vmem [shape: bf16[8,72], index: 4, kind: input, shape index: {}]
  %s5 = inlined_call_operand.vmem [shape: f32[8,1], index: 5, kind: input, shape index: {}]
  %s6 = inlined_call_operand.vmem [shape: bf16[256,64], index: 6, kind: input, shape index: {}]
  %s7 = inlined_call_operand.hbm [shape: f32[2,8,64], index: 7, kind: output, shape index: {}]
  %s8 = sld [smem:[#allocation0]]
  $region61: #{tpu_custom_call.1} parent=0
    _
  %s10 = ssub.s32 1, %s8
  %s11 = scalar_select 0, %s10, %s8
  $region1: #{tpu_custom_call.1} parent=0
    #allocation2 [shape = 'u8[8192]{0}', space=vmem, size = 0x2000, scoped, tag = 'output window, operand 0']
    #allocation3 [shape = 's32[2]{0}', space=sflag, size = 0x8, scoped, tag = 'scoped memory for tpu_custom_call.1']
    %12 = vsyncpa [#allocation3], 0
    %s13 = scalar_lea.sflag [#allocation3], 1
    %14 = vsyncpa %s13, 0
    loop: start=0, step=1, limit=4
    $region2: #{tpu_custom_call.1} parent=1 // loop_pre_header
      _
    $region3: #{tpu_custom_call.1} parent=1 // loop_header
      %s16 = sphi 0, %s20
      %p17 = scmp.ge.s32.totalorder %s16, 4
      %s26 = sphi 0, %s28
      %s29 = sphi 0, %s26
      %s30 = sphi 0, %s29
      %s46 = sphi 0, %s30
      %s50 = sphi 0, %s50
      %s52 = sphi 0, %s50
      %s53 = sphi 0, %s52
      %s67 = sphi 0, %s53
      %s71 = sphi 0, %s71
      %s73 = sphi 0, %s71
      %s74 = sphi 0, %s73
      %s88 = sphi 0, %s74
      %s92 = sphi 0, %s92
      %s94 = sphi 0, %s92
      %s95 = sphi 0, %s94
      %s109 = sphi 0, %s95
      %s113 = sphi 0, %s113
      %s115 = sphi 0, %s113
      %s116 = sphi 0, %s115
      %s130 = sphi 0, %s116
      %s134 = sphi 0, %s134
      %s136 = sphi 0, %s134
      %s137 = sphi 0, %s136
      %s151 = sphi 0, %s137
      %s155 = sphi 0, %s155
      %s157 = sphi 0, %s155
      %s158 = sphi 0, %s157
      %s172 = sphi 0, %s158
      %s178 = sphi 0, %s180
      %s181 = sphi 0, %s178
      %s182 = sphi 0, %s181
      %s198 = sphi 0, %s182
    $region4: #{tpu_custom_call.1} parent=1 // loop_header_branch
      %19 = sbr.rel (%p17) target = $region8
    $region5: #{tpu_custom_call.1} parent=1 // loop_body
      %s21 = ssub.s32 %s16, 1
      %s22 = ssub.s32 %s16, 2
      %s23 = sadd.s32 %s16, 1
      %s24 = ssub.s32 %s16, %s23
      %p25 = scmp.eq.s32.totalorder %s24, 0
      %s27 = sadd.s32 %s26, 1
      %s28 = scalar_select %p25, %s26, %s27
      %p31 = pneg %p25
      %p32 = scmp.eq.s32.totalorder %s16, 1
      %p33 = por %p31, %p32
      %p34 = scmp.ne.s32.totalorder %s26, %s29
      %p35 = scmp.eq.s32.totalorder %s16, 0
      %p36 = por %p34, %p35
      %p37 = scmp.ne.s32.totalorder %s26, %s29
      %p38 = scmp.eq.s32.totalorder %s21, 1
      %p39 = por %p37, %p38
      %p40 = scmp.ne.s32.totalorder %s29, %s30
      %p41 = scmp.eq.s32.totalorder %s21, 0
      %p42 = por %p40, %p41
      %p43 = scmp.ne.s32.totalorder %s29, %s30
      %p44 = scmp.eq.s32.totalorder %s22, 1
      %p45 = por %p43, %p44
      %p47 = scmp.ne.s32.totalorder %s30, %s46
      %p48 = scmp.eq.s32.totalorder %s22, 0
      %p49 = por %p47, %p48
      %s51 = sadd.s32 %s50, 1
      %p54 = scmp.eq.s32.totalorder %s16, 1
      %p55 = scmp.ne.s32.totalorder %s50, %s52
      %p56 = scmp.eq.s32.totalorder %s16, 0
      %p57 = por %p55, %p56
      %p58 = scmp.ne.s32.totalorder %s50, %s52
      %p59 = scmp.eq.s32.totalorder %s21, 1
      %p60 = por %p58, %p59
      %p61 = scmp.ne.s32.totalorder %s52, %s53
      %p62 = scmp.eq.s32.totalorder %s21, 0
      %p63 = por %p61, %p62
      %p64 = scmp.ne.s32.totalorder %s52, %s53
      %p65 = scmp.eq.s32.totalorder %s22, 1
      %p66 = por %p64, %p65
      %p68 = scmp.ne.s32.totalorder %s53, %s67
      %p69 = scmp.eq.s32.totalorder %s22, 0
      %p70 = por %p68, %p69
      %s72 = sadd.s32 %s71, 1
      %p75 = scmp.eq.s32.totalorder %s16, 1
      %p76 = scmp.ne.s32.totalorder %s71, %s73
      %p77 = scmp.eq.s32.totalorder %s16, 0
      %p78 = por %p76, %p77
      %p79 = scmp.ne.s32.totalorder %s71, %s73
      %p80 = scmp.eq.s32.totalorder %s21, 1
      %p81 = por %p79, %p80
      %p82 = scmp.ne.s32.totalorder %s73, %s74
      %p83 = scmp.eq.s32.totalorder %s21, 0
      %p84 = por %p82, %p83
      %p85 = scmp.ne.s32.totalorder %s73, %s74
      %p86 = scmp.eq.s32.totalorder %s22, 1
      %p87 = por %p85, %p86
      %p89 = scmp.ne.s32.totalorder %s74, %s88
      %p90 = scmp.eq.s32.totalorder %s22, 0
      %p91 = por %p89, %p90
      %s93 = sadd.s32 %s92, 1
      %p96 = scmp.eq.s32.totalorder %s16, 1
      %p97 = scmp.ne.s32.totalorder %s92, %s94
      %p98 = scmp.eq.s32.totalorder %s16, 0
      %p99 = por %p97, %p98
      %p100 = scmp.ne.s32.totalorder %s92, %s94
      %p101 = scmp.eq.s32.totalorder %s21, 1
      %p102 = por %p100, %p101
      %p103 = scmp.ne.s32.totalorder %s94, %s95
      %p104 = scmp.eq.s32.totalorder %s21, 0
      %p105 = por %p103, %p104
      %p106 = scmp.ne.s32.totalorder %s94, %s95
      %p107 = scmp.eq.s32.totalorder %s22, 1
      %p108 = por %p106, %p107
      %p110 = scmp.ne.s32.totalorder %s95, %s109
      %p111 = scmp.eq.s32.totalorder %s22, 0
      %p112 = por %p110, %p111
      %s114 = sadd.s32 %s113, 1
      %p117 = scmp.eq.s32.totalorder %s16, 1
      %p118 = scmp.ne.s32.totalorder %s113, %s115
      %p119 = scmp.eq.s32.totalorder %s16, 0
      %p120 = por %p118, %p119
      %p121 = scmp.ne.s32.totalorder %s113, %s115
      %p122 = scmp.eq.s32.totalorder %s21, 1
      %p123 = por %p121, %p122
      %p124 = scmp.ne.s32.totalorder %s115, %s116
      %p125 = scmp.eq.s32.totalorder %s21, 0
      %p126 = por %p124, %p125
      %p127 = scmp.ne.s32.totalorder %s115, %s116
      %p128 = scmp.eq.s32.totalorder %s22, 1
      %p129 = por %p127, %p128
      %p131 = scmp.ne.s32.totalorder %s116, %s130
      %p132 = scmp.eq.s32.totalorder %s22, 0
      %p133 = por %p131, %p132
      %s135 = sadd.s32 %s134, 1
      %p138 = scmp.eq.s32.totalorder %s16, 1
      %p139 = scmp.ne.s32.totalorder %s134, %s136
      %p140 = scmp.eq.s32.totalorder %s16, 0
      %p141 = por %p139, %p140
      %p142 = scmp.ne.s32.totalorder %s134, %s136
      %p143 = scmp.eq.s32.totalorder %s21, 1
      %p144 = por %p142, %p143
      %p145 = scmp.ne.s32.totalorder %s136, %s137
      %p146 = scmp.eq.s32.totalorder %s21, 0
      %p147 = por %p145, %p146
      %p148 = scmp.ne.s32.totalorder %s136, %s137
      %p149 = scmp.eq.s32.totalorder %s22, 1
      %p150 = por %p148, %p149
      %p152 = scmp.ne.s32.totalorder %s137, %s151
      %p153 = scmp.eq.s32.totalorder %s22, 0
      %p154 = por %p152, %p153
      %s156 = sadd.s32 %s155, 1
      %p159 = scmp.eq.s32.totalorder %s16, 1
      %p160 = scmp.ne.s32.totalorder %s155, %s157
      %p161 = scmp.eq.s32.totalorder %s16, 0
      %p162 = por %p160, %p161
      %p163 = scmp.ne.s32.totalorder %s155, %s157
      %p164 = scmp.eq.s32.totalorder %s21, 1
      %p165 = por %p163, %p164
      %p166 = scmp.ne.s32.totalorder %s157, %s158
      %p167 = scmp.eq.s32.totalorder %s21, 0
      %p168 = por %p166, %p167
      %p169 = scmp.ne.s32.totalorder %s157, %s158
      %p170 = scmp.eq.s32.totalorder %s22, 1
      %p171 = por %p169, %p170
      %p173 = scmp.ne.s32.totalorder %s158, %s172
      %p174 = scmp.eq.s32.totalorder %s22, 0
      %p175 = por %p173, %p174
      %s176 = ssub.s32 %s16, %s23
      %p177 = scmp.eq.s32.totalorder %s176, 0
      %s179 = sadd.s32 %s178, 1
      %s180 = scalar_select %p177, %s178, %s179
      %p183 = pneg %p177
      %p184 = scmp.eq.s32.totalorder %s16, 1
      %p185 = por %p183, %p184
      %p186 = scmp.ne.s32.totalorder %s178, %s181
      %p187 = scmp.eq.s32.totalorder %s16, 0
      %p188 = por %p186, %p187
      %p189 = scmp.ne.s32.totalorder %s178, %s181
      %p190 = scmp.eq.s32.totalorder %s21, 1
      %p191 = por %p189, %p190
      %p192 = scmp.ne.s32.totalorder %s181, %s182
      %p193 = scmp.eq.s32.totalorder %s21, 0
      %p194 = por %p192, %p193
      %p195 = scmp.ne.s32.totalorder %s181, %s182
      %p196 = scmp.eq.s32.totalorder %s22, 1
      %p197 = por %p195, %p196
      %p199 = scmp.ne.s32.totalorder %s182, %s198
      %p200 = scmp.eq.s32.totalorder %s22, 0
      %p201 = por %p199, %p200
      %p202 = scmp.le.s32.totalorder 1, %s16
      %p203 = scmp.lt.s32.totalorder %s16, 3
      %p204 = pnand %p202, %p203
      %p205 = pneg %p204
      // Predicated region
      $region9: #{tpu_custom_call.1} parent=5 // pred_check
        _
      $region10: #{tpu_custom_call.1} parent=5 // pred_check_branch
        %207 = sbr.rel (%p204) target = $region12
      $region11: #{tpu_custom_call.1} parent=5 // pred_region
        %s208 = ssub.s32 %s16, 1
        // Predicated region
        $region13: #{tpu_custom_call.1} parent=11 // pred_check
          %p209 = pneg %p63
        $region14: #{tpu_custom_call.1} parent=11 // pred_check_branch
          %211 = sbr.rel (%p209) target = $region16
        $region15: #{tpu_custom_call.1} parent=11 // pred_region
          _
        $region16: #{tpu_custom_call.1} parent=11 // pred_fallthru
          _
        // Predicated region
        $region17: #{tpu_custom_call.1} parent=11 // pred_check
          %p212 = pneg %p84
        $region18: #{tpu_custom_call.1} parent=11 // pred_check_branch
          %214 = sbr.rel (%p212) target = $region20
        $region19: #{tpu_custom_call.1} parent=11 // pred_region
          _
        $region20: #{tpu_custom_call.1} parent=11 // pred_fallthru
          _
        // Predicated region
        $region21: #{tpu_custom_call.1} parent=11 // pred_check
          %p215 = pneg %p105
        $region22: #{tpu_custom_call.1} parent=11 // pred_check_branch
          %217 = sbr.rel (%p215) target = $region24
        $region23: #{tpu_custom_call.1} parent=11 // pred_region
          _
        $region24: #{tpu_custom_call.1} parent=11 // pred_fallthru
          _
        // Predicated region
        $region25: #{tpu_custom_call.1} parent=11 // pred_check
          %p218 = pneg %p126
        $region26: #{tpu_custom_call.1} parent=11 // pred_check_branch
          %220 = sbr.rel (%p218) target = $region28
        $region27: #{tpu_custom_call.1} parent=11 // pred_region
          _
        $region28: #{tpu_custom_call.1} parent=11 // pred_fallthru
          _
        // Predicated region
        $region29: #{tpu_custom_call.1} parent=11 // pred_check
          %p221 = pneg %p147
        $region30: #{tpu_custom_call.1} parent=11 // pred_check_branch
          %223 = sbr.rel (%p221) target = $region32
        $region31: #{tpu_custom_call.1} parent=11 // pred_region
          _
        $region32: #{tpu_custom_call.1} parent=11 // pred_fallthru
          _
        // Predicated region
        $region33: #{tpu_custom_call.1} parent=11 // pred_check
          %p224 = pneg %p168
        $region34: #{tpu_custom_call.1} parent=11 // pred_check_branch
          %226 = sbr.rel (%p224) target = $region36
        $region35: #{tpu_custom_call.1} parent=11 // pred_region
          _
        $region36: #{tpu_custom_call.1} parent=11 // pred_fallthru
          _
      $region12: #{tpu_custom_call.1} parent=5 // pred_fallthru
        _
      %p227 = scmp.lt.s32.totalorder %s16, 2
      // Predicated region
      $region37: #{tpu_custom_call.1} parent=5 // pred_check
        %p228 = pneg %p227
      $region38: #{tpu_custom_call.1} parent=5 // pred_check_branch
        %230 = sbr.rel (%p228) target = $region40
      $region39: #{tpu_custom_call.1} parent=5 // pred_region
        // Predicated region
        $region41: #{tpu_custom_call.1} parent=39 // pred_check
          %p231 = pneg %p36
        $region42: #{tpu_custom_call.1} parent=39 // pred_check_branch
          %233 = sbr.rel (%p231) target = $region44
        $region43: #{tpu_custom_call.1} parent=39 // pred_region
          %p234 = scmp.lt.s32.totalorder %s16, 1
          %s235 = scalar_select %p234, %s16, 1
          %s236 = smul.addr %s235, 2
          %s237 = smul.addr %s236, 8
          %s238 = scalar_lea.vmem %s0, %s237
        $region44: #{tpu_custom_call.1} parent=39 // pred_fallthru
          _
      $region40: #{tpu_custom_call.1} parent=5 // pred_fallthru
        _
      %p239 = scmp.le.s32.totalorder 1, %s16
      %p240 = scmp.lt.s32.totalorder %s16, 3
      %p241 = pnand %p239, %p240
      %p242 = pneg %p241
      // Predicated region
      $region45: #{tpu_custom_call.1} parent=5 // pred_check
        _
      $region46: #{tpu_custom_call.1} parent=5 // pred_check_branch
        %244 = sbr.rel (%p241) target = $region48
      $region47: #{tpu_custom_call.1} parent=5 // pred_region
        %s245 = ssub.s32 %s16, 1
        %p246 = scmp.lt.s32.totalorder %s21, 1
        %s247 = scalar_select %p246, %s21, 1
        %s248 = smul.addr %s247, 2
        %s249 = smul.addr %s248, 8
        %s250 = scalar_lea.vmem %s0, %s249
        %p251 = pneg %p42
        %p252 = pneg %p39
        %p253 = pneg %p63
        %p254 = pneg %p60
        %p255 = pneg %p84
        %p256 = pneg %p81
        %p257 = pneg %p105
        %p258 = pneg %p102
        %p259 = pneg %p126
        %p260 = pneg %p123
        %p261 = pneg %p147
        %p262 = pneg %p144
        %p263 = pneg %p168
        %p264 = pneg %p165
        %p265 = pneg %p194
        %p266 = pneg %p191
        %s267 = sand.u32 %s181, 1
        %s268 = scalar_lea.sflag [#allocation3], %s267
        %s269 = sand.u32 %s181, 1
        %s270 = smul.addr %s269, 8
        %s271 = scalar_lea.vmem [#allocation2], %s270
        %p272 = scmp.lt.s32.totalorder %s21, 1
        %s273 = scalar_select %p272, %s21, 1
        %s274 = smul.addr %s273, 2
        %s275 = smul.addr %s274, 8
        %s276 = scalar_lea.vmem %s0, %s275
        %v278 = vld [vmem:[%s276] sm:$0xff]
        %v279 = vld [vmem:[%s276 + $0x8] sm:$0xff]
        %v280 = vld [vmem:[%s1] sm:$0xff]
        %v281 = vld [vmem:[%s1 + $0x8] sm:$0xff]
        %v282 = vld [vmem:[%s1 + $0x10] sm:$0x1]
        %v283 = vld [vmem:[%s1 + $0x18] sm:$0x1]
        %v284 = vld [vmem:[%s2] sm:$0xf]
        %v285 = vld [vmem:[%s3] sm:$0xff]
        %288 = vrot.lane.b32.xlu0 %v278, 17
        %v289 = vpop.permute.xlu0 %288
        %290 = vrot.lane.b32.xlu0 %v279, 17
        %v291 = vpop.permute.xlu0 %290
        %vm292 = vcmask 138240
        %v293 = vsel %vm292, %v289, %v291
        %v296 = vsel %vm292, 0.0, %v289
        %v297 = vlaneseq
        %v298 = vshrl.u32 %v297, 7
        %v299 = vsub.s32 0, %v298
        %v300 = vrot.slane %v280, %v299
        %v301 = vlaneseq
        %v302 = vshrl.u32 %v301, 7
        %v303 = vsub.s32 0, %v302
        %v304 = vrot.slane %v281, %v303
        %v305 = vmul.f32 %v296, %v300
        %v306 = vmul.f32 %v293, %v304
        %307 = vrot.lane.b32.xlu0 %v278, 16
        %v308 = vpop.permute.xlu0 %307
        %309 = vrot.lane.b32.xlu0 %v279, 16
        %v310 = vpop.permute.xlu0 %309
        %vm311 = vcmask 130048
        %v312 = vsel %vm311, %v308, %v310
        %v315 = vsel %vm311, 0.0, %v308
        %v316 = vlaneseq
        %v317 = vshrl.u32 %v316, 7
        %v318 = vsub.s32 1, %v317
        %v319 = vrot.slane %v280, %v318
        %v320 = vlaneseq
        %v321 = vshrl.u32 %v320, 7
        %v322 = vsub.s32 1, %v321
        %v323 = vrot.slane %v281, %v322
        %v324 = vmul.f32 %v315, %v319
        %v325 = vmul.f32 %v312, %v323
        %326 = vrot.lane.b32.xlu0 %v278, 15
        %v327 = vpop.permute.xlu0 %326
        %328 = vrot.lane.b32.xlu0 %v279, 15
        %v329 = vpop.permute.xlu0 %328
        %vm330 = vcmask 121856
        %v331 = vsel %vm330, %v327, %v329
        %v334 = vsel %vm330, 0.0, %v327
        %v335 = vlaneseq
        %v336 = vshrl.u32 %v335, 7
        %v337 = vsub.s32 2, %v336
        %v338 = vrot.slane %v280, %v337
        %v339 = vlaneseq
        %v340 = vshrl.u32 %v339, 7
        %v341 = vsub.s32 2, %v340
        %v342 = vrot.slane %v281, %v341
        %v343 = vmul.f32 %v334, %v338
        %v344 = vmul.f32 %v331, %v342
        %345 = vrot.lane.b32.xlu0 %v278, 1
        %v346 = vpop.permute.xlu0 %345
        %347 = vrot.lane.b32.xlu0 %v279, 1
        %v348 = vpop.permute.xlu0 %347
        %vm349 = vcmask 7168
        %v350 = vsel %vm349, %v346, %v348
        %v353 = vsel %vm349, 0.0, %v346
        %v354 = vlaneseq
        %v355 = vshrl.u32 %v354, 7
        %v356 = vsub.s32 3, %v355
        %v357 = vrot.slane %v280, %v356
        %v358 = vlaneseq
        %v359 = vshrl.u32 %v358, 7
        %v360 = vsub.s32 3, %v359
        %v361 = vrot.slane %v281, %v360
        %v362 = vmul.f32 %v353, %v357
        %v363 = vmul.f32 %v350, %v361
        %v364 = vlaneseq
        %v365 = vshrl.u32 %v364, 7
        %v366 = vsub.s32 4, %v365
        %v367 = vrot.slane %v280, %v366
        %v368 = vlaneseq
        %v369 = vshrl.u32 %v368, 7
        %v370 = vsub.s32 4, %v369
        %v371 = vrot.slane %v281, %v370
        %v372 = vmul.f32 %v278, %v367
        %v373 = vmul.f32 %v279, %v371
        %374 = vrot.lane.b32.xlu0 %v278, 127
        %v375 = vpop.permute.xlu0 %374
        %376 = vrot.lane.b32.xlu0 %v279, 127
        %v377 = vpop.permute.xlu0 %376
        %vm378 = vcmask 1039360
        %v379 = vsel %vm378, %v375, %v377
        %v382 = vsel %vm378, %v377, 0.0
        %v383 = vlaneseq
        %v384 = vshrl.u32 %v383, 7
        %v385 = vsub.s32 5, %v384
        %v386 = vrot.slane %v280, %v385
        %v387 = vlaneseq
        %v388 = vshrl.u32 %v387, 7
        %v389 = vsub.s32 5, %v388
        %v390 = vrot.slane %v281, %v389
        %v391 = vmul.f32 %v379, %v386
        %v392 = vmul.f32 %v382, %v390
        %393 = vrot.lane.b32.xlu0 %v278, 113
        %v394 = vpop.permute.xlu0 %393
        %395 = vrot.lane.b32.xlu0 %v279, 113
        %v396 = vpop.permute.xlu0 %395
        %vm397 = vcmask 924672
        %v398 = vsel %vm397, %v394, %v396
        %v401 = vsel %vm397, %v396, 0.0
        %v402 = vlaneseq
        %v403 = vshrl.u32 %v402, 7
        %v404 = vsub.s32 6, %v403
        %v405 = vrot.slane %v280, %v404
        %v406 = vlaneseq
        %v407 = vshrl.u32 %v406, 7
        %v408 = vsub.s32 6, %v407
        %v409 = vrot.slane %v281, %v408
        %v410 = vmul.f32 %v398, %v405
        %v411 = vmul.f32 %v401, %v409
        %412 = vrot.lane.b32.xlu0 %v278, 112
        %v413 = vpop.permute.xlu0 %412
        %414 = vrot.lane.b32.xlu0 %v279, 112
        %v415 = vpop.permute.xlu0 %414
        %vm416 = vcmask 916480
        %v417 = vsel %vm416, %v413, %v415
        %v420 = vsel %vm416, %v415, 0.0
        %v421 = vlaneseq
        %v422 = vshrl.u32 %v421, 7
        %v423 = vsub.s32 7, %v422
        %v424 = vrot.slane %v280, %v423
        %v425 = vlaneseq
        %v426 = vshrl.u32 %v425, 7
        %v427 = vsub.s32 7, %v426
        %v428 = vrot.slane %v281, %v427
        %v429 = vmul.f32 %v417, %v424
        %v430 = vmul.f32 %v420, %v428
        %431 = vrot.lane.b32.xlu0 %v278, 111
        %v432 = vpop.permute.xlu0 %431
        %433 = vrot.lane.b32.xlu0 %v279, 111
        %v434 = vpop.permute.xlu0 %433
        %vm435 = vcmask 908288
        %v436 = vsel %vm435, %v432, %v434
        %v439 = vsel %vm435, %v434, 0.0
        %v440 = vlaneseq
        %v441 = vshrl.u32 %v440, 7
        %v442 = vsub.s32 0, %v441
        %v443 = vrot.slane %v282, %v442
        %v444 = vlaneseq
        %v445 = vshrl.u32 %v444, 7
        %v446 = vsub.s32 0, %v445
        %v447 = vrot.slane %v283, %v446
        %v448 = vmul.f32 %v436, %v443
        %v449 = vmul.f32 %v439, %v447
        %v450 = vpack.c.bf16 %v324, %v305
        %v451 = vpack.c.bf16 %v325, %v306
        %v452 = vpack.c.bf16 %v362, %v343
        %v453 = vpack.c.bf16 %v363, %v344
        %v454 = vpack.c.bf16 %v391, %v372
        %v455 = vpack.c.bf16 %v392, %v373
        %v456 = vpack.c.bf16 %v429, %v410
        %v457 = vpack.c.bf16 %v430, %v411
        %v458 = vpack.c.bf16 %v448, %v448
        %v459 = vpack.c.bf16 %v449, %v449
        %461 = vset.pattern.permute.xlu0 0
        %462 = vperm.xlu0 %461, %v285
        %v463 = vpop.permute.xlu0 %462
        %vm465 = vcmask 588800
        %v467 = vsel %vm465, %v284, 0
        %vm469 = vcmask 1043456
        %v471 = vsel %vm469, %v458, 0
        %v474 = vsel %vm469, %v459, 0
        %476 = vmatprep.subr.bf16.mxu0 %v451
        %477 = vmatpush1.bf16.msra.mxu0 %v450
        %478 = vmatprep.subr.bf16.mxu0 %v453
        %479 = vmatpush1.bf16.msra.mxu0 %v452
        %480 = vmatprep.subr.bf16.mxu0 %v455
        %481 = vmatpush1.bf16.msra.mxu0 %v454
        %482 = vmatprep.subr.bf16.mxu0 %v457
        %483 = vmatpush1.bf16.msra.mxu0 %v456
        %484 = vmatprep.subr.bf16.mxu0 %v474
        %485 = vmatpush1.bf16.msra.mxu0 %v471
        %486 = vmatprep.subr.bf16.mxu0 0
        %487 = vmatpush1.bf16.msra.mxu0 0
        %488 = vmatprep.subr.bf16.mxu0 0
        %489 = vmatpush1.bf16.msra.mxu0 0
        %490 = vmatprep.subr.bf16.mxu0 0
        %491 = vmatpush1.bf16.msra.mxu0 0
        %492 = vmatprep.subr.bf16.mxu0 0
        %493 = vmatpush1.bf16.msra.mxu0 0
        %494 = vmatprep.subr.bf16.mxu0 0
        %495 = vmatpush1.bf16.msra.mxu0 0
        %496 = vmatprep.subr.bf16.mxu0 0
        %497 = vmatpush1.bf16.msra.mxu0 0
        %498 = vmatprep.subr.bf16.mxu0 0
        %499 = vmatpush1.bf16.msra.mxu0 0
        %500 = vmatprep.subr.bf16.mxu0 0
        %501 = vmatpush1.bf16.msra.mxu0 0
        %502 = vmatprep.subr.bf16.mxu0 0
        %503 = vmatpush1.bf16.msra.mxu0 0
        %504 = vmatprep.subr.bf16.mxu0 0
        %505 = vmatpush1.bf16.msra.mxu0 0
        %506 = vmatprep.subr.bf16.mxu0 0
        %507 = vmatpush1.bf16.msra.mxu0 0
        %508 = vmatprep.mubr.bf16.mxu0 0
        %509 = vmatmul.mubr.bf16.gmra.mrb[0].mxu0 %v467
        %v510 = vpop.f32.mrb[0].mxu0
        %v511 = vadd.f32 %v463, %v510
        %v512 = vpop.f32.mrb[0].mxu0
        %v513 = vadd.f32 %v463, %v512
        %v514 = vpop.f32.mrb[0].mxu0
        %v515 = vpop.f32.mrb[0].mxu0
        %516 = vdwg.mxu0
        %vm517 = vcmp.gt.f32.partialorder %v511, 0.0
        %vm518 = vcmp.gt.f32.partialorder %v513, 0.0
        %v519 = vmul.f32 %v511, 0.2
        %v520 = vmul.f32 %v513, 0.2
        %v521 = vsel %vm517, %v511, %v519
        %v522 = vsel %vm518, %v513, %v520
        %v523 = vld [vmem:[%s4] sm:$0xf]
        %v524 = vld [vmem:[%s5] sm:$0xff]
        %527 = vrot.lane.b32.xlu0 %v521, 17
        %v528 = vpop.permute.xlu0 %527
        %529 = vrot.lane.b32.xlu0 %v522, 17
        %v530 = vpop.permute.xlu0 %529
        %v531 = vsel %vm292, %v528, %v530
        %v534 = vsel %vm292, 0.0, %v528
        %v535 = vmul.f32 %v534, %v300
        %v536 = vmul.f32 %v531, %v304
        %537 = vrot.lane.b32.xlu0 %v521, 16
        %v538 = vpop.permute.xlu0 %537
        %539 = vrot.lane.b32.xlu0 %v522, 16
        %v540 = vpop.permute.xlu0 %539
        %v541 = vsel %vm311, %v538, %v540
        %v544 = vsel %vm311, 0.0, %v538
        %v545 = vmul.f32 %v544, %v319
        %v546 = vmul.f32 %v541, %v323
        %547 = vrot.lane.b32.xlu0 %v521, 15
        %v548 = vpop.permute.xlu0 %547
        %549 = vrot.lane.b32.xlu0 %v522, 15
        %v550 = vpop.permute.xlu0 %549
        %v551 = vsel %vm330, %v548, %v550
        %v554 = vsel %vm330, 0.0, %v548
        %v555 = vmul.f32 %v554, %v338
        %v556 = vmul.f32 %v551, %v342
        %557 = vrot.lane.b32.xlu0 %v521, 1
        %v558 = vpop.permute.xlu0 %557
        %559 = vrot.lane.b32.xlu0 %v522, 1
        %v560 = vpop.permute.xlu0 %559
        %v561 = vsel %vm349, %v558, %v560
        %v564 = vsel %vm349, 0.0, %v558
        %v565 = vmul.f32 %v564, %v357
        %v566 = vmul.f32 %v561, %v361
        %v567 = vmul.f32 %v521, %v367
        %v568 = vmul.f32 %v522, %v371
        %569 = vrot.lane.b32.xlu0 %v521, 127
        %v570 = vpop.permute.xlu0 %569
        %571 = vrot.lane.b32.xlu0 %v522, 127
        %v572 = vpop.permute.xlu0 %571
        %v573 = vsel %vm378, %v570, %v572
        %v576 = vsel %vm378, %v572, 0.0
        %v577 = vmul.f32 %v573, %v386
        %v578 = vmul.f32 %v576, %v390
        %579 = vrot.lane.b32.xlu0 %v521, 113
        %v580 = vpop.permute.xlu0 %579
        %581 = vrot.lane.b32.xlu0 %v522, 113
        %v582 = vpop.permute.xlu0 %581
        %v583 = vsel %vm397, %v580, %v582
        %v586 = vsel %vm397, %v582, 0.0
        %v587 = vmul.f32 %v583, %v405
        %v588 = vmul.f32 %v586, %v409
        %589 = vrot.lane.b32.xlu0 %v521, 112
        %v590 = vpop.permute.xlu0 %589
        %591 = vrot.lane.b32.xlu0 %v522, 112
        %v592 = vpop.permute.xlu0 %591
        %v593 = vsel %vm416, %v590, %v592
        %v596 = vsel %vm416, %v592, 0.0
        %v597 = vmul.f32 %v593, %v424
        %v598 = vmul.f32 %v596, %v428
        %599 = vrot.lane.b32.xlu0 %v521, 111
        %v600 = vpop.permute.xlu0 %599
        %601 = vrot.lane.b32.xlu0 %v522, 111
        %v602 = vpop.permute.xlu0 %601
        %v603 = vsel %vm435, %v600, %v602
        %v606 = vsel %vm435, %v602, 0.0
        %v607 = vmul.f32 %v603, %v443
        %v608 = vmul.f32 %v606, %v447
        %v609 = vpack.c.bf16 %v545, %v535
        %v610 = vpack.c.bf16 %v546, %v536
        %v611 = vpack.c.bf16 %v565, %v555
        %v612 = vpack.c.bf16 %v566, %v556
        %v613 = vpack.c.bf16 %v577, %v567
        %v614 = vpack.c.bf16 %v578, %v568
        %v615 = vpack.c.bf16 %v597, %v587
        %v616 = vpack.c.bf16 %v598, %v588
        %v617 = vpack.c.bf16 %v607, %v607
        %v618 = vpack.c.bf16 %v608, %v608
        %620 = vset.pattern.permute.xlu0 0
        %621 = vperm.xlu0 %620, %v524
        %v622 = vpop.permute.xlu0 %621
        %v625 = vsel %vm465, %v523, 0
        %v628 = vsel %vm469, %v617, 0
        %v631 = vsel %vm469, %v618, 0
        %633 = vmatprep.subr.bf16.mxu0 %v610
        %634 = vmatpush1.bf16.msra.mxu0 %v609
        %635 = vmatprep.subr.bf16.mxu0 %v612
        %636 = vmatpush1.bf16.msra.mxu0 %v611
        %637 = vmatprep.subr.bf16.mxu0 %v614
        %638 = vmatpush1.bf16.msra.mxu0 %v613
        %639 = vmatprep.subr.bf16.mxu0 %v616
        %640 = vmatpush1.bf16.msra.mxu0 %v615
        %641 = vmatprep.subr.bf16.mxu0 %v631
        %642 = vmatpush1.bf16.msra.mxu0 %v628
        %643 = vmatprep.subr.bf16.mxu0 0
        %644 = vmatpush1.bf16.msra.mxu0 0
        %645 = vmatprep.subr.bf16.mxu0 0
        %646 = vmatpush1.bf16.msra.mxu0 0
        %647 = vmatprep.subr.bf16.mxu0 0
        %648 = vmatpush1.bf16.msra.mxu0 0
        %649 = vmatprep.subr.bf16.mxu0 0
        %650 = vmatpush1.bf16.msra.mxu0 0
        %651 = vmatprep.subr.bf16.mxu0 0
        %652 = vmatpush1.bf16.msra.mxu0 0
        %653 = vmatprep.subr.bf16.mxu0 0
        %654 = vmatpush1.bf16.msra.mxu0 0
        %655 = vmatprep.subr.bf16.mxu0 0
        %656 = vmatpush1.bf16.msra.mxu0 0
        %657 = vmatprep.subr.bf16.mxu0 0
        %658 = vmatpush1.bf16.msra.mxu0 0
        %659 = vmatprep.subr.bf16.mxu0 0
        %660 = vmatpush1.bf16.msra.mxu0 0
        %661 = vmatprep.subr.bf16.mxu0 0
        %662 = vmatpush1.bf16.msra.mxu0 0
        %663 = vmatprep.subr.bf16.mxu0 0
        %664 = vmatpush1.bf16.msra.mxu0 0
        %665 = vmatprep.mubr.bf16.mxu0 0
        %666 = vmatmul.mubr.bf16.gmra.mrb[0].mxu0 %v625
        %v667 = vpop.f32.mrb[0].mxu0
        %v668 = vadd.f32 %v622, %v667
        %v669 = vpop.f32.mrb[0].mxu0
        %v670 = vadd.f32 %v622, %v669
        %v671 = vpop.f32.mrb[0].mxu0
        %v672 = vpop.f32.mrb[0].mxu0
        %673 = vdwg.mxu0
        %vm674 = vcmp.gt.f32.partialorder %v668, 0.0
        %vm675 = vcmp.gt.f32.partialorder %v670, 0.0
        %v676 = vmul.f32 %v668, 0.2
        %v677 = vmul.f32 %v670, 0.2
        %v678 = vsel %vm674, %v668, %v676
        %v679 = vsel %vm675, %v670, %v677
        %v680 = vpack.c.bf16 %v678, %v678
        %v681 = vpack.c.bf16 %v679, %v679
        %v682 = vld [vmem:[%s6] sm:$0xf]
        %v683 = vld [vmem:[%s6 + $0x4] sm:$0xf]
        %v684 = vld [vmem:[%s6 + $0x8] sm:$0xf]
        %v685 = vld [vmem:[%s6 + $0xc] sm:$0xf]
        %v686 = vld [vmem:[%s6 + $0x10] sm:$0xf]
        %v687 = vld [vmem:[%s6 + $0x14] sm:$0xf]
        %v688 = vld [vmem:[%s6 + $0x18] sm:$0xf]
        %v689 = vld [vmem:[%s6 + $0x1c] sm:$0xf]
        %v690 = vld [vmem:[%s6 + $0x20] sm:$0xf]
        %v691 = vld [vmem:[%s6 + $0x24] sm:$0xf]
        %v692 = vld [vmem:[%s6 + $0x28] sm:$0xf]
        %v693 = vld [vmem:[%s6 + $0x2c] sm:$0xf]
        %v694 = vld [vmem:[%s6 + $0x30] sm:$0xf]
        %v695 = vld [vmem:[%s6 + $0x34] sm:$0xf]
        %v696 = vld [vmem:[%s6 + $0x38] sm:$0xf]
        %v697 = vld [vmem:[%s6 + $0x3c] sm:$0xf]
        %v698 = vld [vmem:[%s6 + $0x40] sm:$0xf]
        %v699 = vld [vmem:[%s6 + $0x44] sm:$0xf]
        %v700 = vld [vmem:[%s6 + $0x48] sm:$0xf]
        %v701 = vld [vmem:[%s6 + $0x4c] sm:$0xf]
        %v702 = vld [vmem:[%s6 + $0x50] sm:$0xf]
        %v703 = vld [vmem:[%s6 + $0x54] sm:$0xf]
        %v704 = vld [vmem:[%s6 + $0x58] sm:$0xf]
        %v705 = vld [vmem:[%s6 + $0x5c] sm:$0xf]
        %v706 = vld [vmem:[%s6 + $0x60] sm:$0xf]
        %v707 = vld [vmem:[%s6 + $0x64] sm:$0xf]
        %v708 = vld [vmem:[%s6 + $0x68] sm:$0xf]
        %v709 = vld [vmem:[%s6 + $0x6c] sm:$0xf]
        %v710 = vld [vmem:[%s6 + $0x70] sm:$0xf]
        %v711 = vld [vmem:[%s6 + $0x74] sm:$0xf]
        %v712 = vld [vmem:[%s6 + $0x78] sm:$0xf]
        %v713 = vld [vmem:[%s6 + $0x7c] sm:$0xf]
        %v746 = vunpack.c.l.b16 %v682
        %v747 = vunpack.c.l.b16 %v683
        %v748 = vunpack.c.l.b16 %v684
        %v749 = vunpack.c.l.b16 %v685
        %v750 = vunpack.c.l.b16 %v686
        %v751 = vunpack.c.l.b16 %v687
        %v752 = vunpack.c.l.b16 %v688
        %v753 = vunpack.c.l.b16 %v689
        %v754 = vunpack.c.l.b16 %v690
        %v755 = vunpack.c.l.b16 %v691
        %v756 = vunpack.c.l.b16 %v692
        %v757 = vunpack.c.l.b16 %v693
        %v758 = vunpack.c.l.b16 %v694
        %v759 = vunpack.c.l.b16 %v695
        %v760 = vunpack.c.l.b16 %v696
        %v761 = vunpack.c.l.b16 %v697
        %v762 = vunpack.c.l.b16 %v698
        %v763 = vunpack.c.l.b16 %v699
        %v764 = vunpack.c.l.b16 %v700
        %v765 = vunpack.c.l.b16 %v701
        %v766 = vunpack.c.l.b16 %v702
        %v767 = vunpack.c.l.b16 %v703
        %v768 = vunpack.c.l.b16 %v704
        %v769 = vunpack.c.l.b16 %v705
        %v770 = vunpack.c.l.b16 %v706
        %v771 = vunpack.c.l.b16 %v707
        %v772 = vunpack.c.l.b16 %v708
        %v773 = vunpack.c.l.b16 %v709
        %v774 = vunpack.c.l.b16 %v710
        %v775 = vunpack.c.l.b16 %v711
        %v776 = vunpack.c.l.b16 %v712
        %v777 = vunpack.c.l.b16 %v713
        %v778 = vpack.c.b16 %v747, %v746
        %v779 = vpack.c.b16 %v749, %v748
        %v780 = vpack.c.b16 %v751, %v750
        %v781 = vpack.c.b16 %v753, %v752
        %v782 = vpack.c.b16 %v755, %v754
        %v783 = vpack.c.b16 %v757, %v756
        %v784 = vpack.c.b16 %v759, %v758
        %v785 = vpack.c.b16 %v761, %v760
        %v786 = vpack.c.b16 %v763, %v762
        %v787 = vpack.c.b16 %v765, %v764
        %v788 = vpack.c.b16 %v767, %v766
        %v789 = vpack.c.b16 %v769, %v768
        %v790 = vpack.c.b16 %v771, %v770
        %v791 = vpack.c.b16 %v773, %v772
        %v792 = vpack.c.b16 %v775, %v774
        %v793 = vpack.c.b16 %v777, %v776
        %810 = vmatprep.subr.bf16.mxu0 0
        %811 = vmatpush1.bf16.msra.mxu0 %v778
        %812 = vmatprep.subr.bf16.mxu0 0
        %813 = vmatpush1.bf16.msra.mxu0 %v779
        %814 = vmatprep.subr.bf16.mxu0 0
        %815 = vmatpush1.bf16.msra.mxu0 %v780
        %816 = vmatprep.subr.bf16.mxu0 0
        %817 = vmatpush1.bf16.msra.mxu0 %v781
        %818 = vmatprep.subr.bf16.mxu0 0
        %819 = vmatpush1.bf16.msra.mxu0 %v782
        %820 = vmatprep.subr.bf16.mxu0 0
        %821 = vmatpush1.bf16.msra.mxu0 %v783
        %822 = vmatprep.subr.bf16.mxu0 0
        %823 = vmatpush1.bf16.msra.mxu0 %v784
        %824 = vmatprep.subr.bf16.mxu0 0
        %825 = vmatpush1.bf16.msra.mxu0 %v785
        %826 = vmatprep.subr.bf16.mxu0 0
        %827 = vmatpush1.bf16.msra.mxu0 %v786
        %828 = vmatprep.subr.bf16.mxu0 0
        %829 = vmatpush1.bf16.msra.mxu0 %v787
        %830 = vmatprep.subr.bf16.mxu0 0
        %831 = vmatpush1.bf16.msra.mxu0 %v788
        %832 = vmatprep.subr.bf16.mxu0 0
        %833 = vmatpush1.bf16.msra.mxu0 %v789
        %834 = vmatprep.subr.bf16.mxu0 0
        %835 = vmatpush1.bf16.msra.mxu0 %v790
        %836 = vmatprep.subr.bf16.mxu0 0
        %837 = vmatpush1.bf16.msra.mxu0 %v791
        %838 = vmatprep.subr.bf16.mxu0 0
        %839 = vmatpush1.bf16.msra.mxu0 %v792
        %840 = vmatprep.subr.bf16.mxu0 0
        %841 = vmatpush1.bf16.msra.mxu0 %v793
        %842 = vmatprep.mubr.bf16.mxu0 %v681
        %843 = vmatmul.mubr.bf16.gmra.mrb[0].mxu0 %v680
        %v844 = vpop.f32.mrb[0].mxu0
        %v845 = vadd.f32 0.0, %v844
        %v846 = vpop.f32.mrb[0].mxu0
        %v847 = vpop.f32.mrb[0].mxu0
        %v848 = vpop.f32.mrb[0].mxu0
        %849 = vdwg.mxu0
        %vm850 = vcmask 523264
        %851 = vst.msk [vmem:[%s271] sm:$0xff] %vm850, %v845
        %s852 = sand.u32 %s181, 1
        %s853 = scalar_lea.sflag [#allocation3], %s852
        %s854 = sand.u32 %s181, 1
        %s855 = smul.addr %s854, 8
        %s856 = scalar_lea.vmem [#allocation2], %s855
        // Predicated region
        $region49: #{tpu_custom_call.1} parent=47 // pred_check
          %p857 = pneg %p191
        $region50: #{tpu_custom_call.1} parent=47 // pred_check_branch
          %859 = sbr.rel (%p857) target = $region52
        $region51: #{tpu_custom_call.1} parent=47 // pred_region
          %s861 = ssub.s32 128, 128
          %862 = vsyncadd %s853, %s861
          %s863 = smul.addr %s21, 128
          %s864 = scalar_lea.hbm %s7, %s863
          %s866 = sshll.u32 %s856, 4
          %s867 = int_to_ptr.vmem [resolvable:$true] %s866
          %869 = dma.vmem_to_hbm [thread:$0]  %s867, 128, %s864, %s853
        $region52: #{tpu_custom_call.1} parent=47 // pred_fallthru
          _
      $region48: #{tpu_custom_call.1} parent=5 // pred_fallthru
        _
      %p870 = scmp.le.s32.totalorder 2, %s16
      // Predicated region
      $region53: #{tpu_custom_call.1} parent=5 // pred_check
        %p871 = pneg %p870
      $region54: #{tpu_custom_call.1} parent=5 // pred_check_branch
        %873 = sbr.rel (%p871) target = $region56
      $region55: #{tpu_custom_call.1} parent=5 // pred_region
        %s874 = ssub.s32 %s16, 2
        // Predicated region
        $region57: #{tpu_custom_call.1} parent=55 // pred_check
          %p875 = pneg %p197
        $region58: #{tpu_custom_call.1} parent=55 // pred_check_branch
          %877 = sbr.rel (%p875) target = $region60
        $region59: #{tpu_custom_call.1} parent=55 // pred_region
          %s878 = sand.u32 %s182, 1
          %s879 = scalar_lea.sflag [#allocation3], %s878
          %s880 = sand.u32 %s182, 1
          %s881 = smul.addr %s880, 8
          %s882 = scalar_lea.vmem [#allocation2], %s881
          %883 = dma.done %s879, 128
        $region60: #{tpu_custom_call.1} parent=55 // pred_fallthru
          _
      $region56: #{tpu_custom_call.1} parent=5 // pred_fallthru
        _
    $region6: #{tpu_custom_call.1} parent=1 // loop_footer
      %s20 = sadd.s32 1, %s16
    $region7: #{tpu_custom_call.1} parent=1 // loop_footer_branch
      %15 = sbr.rel target = $region3
    $region8: #{tpu_custom_call.1} parent=1 // loop_exit
      _
    %884 = vsyncpa [#allocation3], 1
    %s885 = scalar_lea.sflag [#allocation3], 1
    %886 = vsyncpa %s885, 1

</llo_original>
